<compile_context>
chip_gen: v6e
topology: v6e:2x2x1
jax: 0.10.0
libtpu: 0.0.40
codegen_flags: <defaults>
</compile_context>

<pallas_src>
import math

import jax
import jax.numpy as jnp
from jax.experimental import pallas as pl
from jax.experimental.pallas import tpu as pltpu


def make_positional_encoding_table(d_model: int, max_len: int = 200,
                                   dtype=jnp.float32) -> jnp.ndarray:
    """Same math as the PyTorch __init__ (d_model assumed even, as in torch)."""
    assert d_model % 2 == 0, "PositionalEncoding assumes an even d_model"
    position = jnp.arange(max_len, dtype=jnp.float32)[:, None]            # (L, 1)
    div_term = jnp.exp(jnp.arange(0, d_model, 2, dtype=jnp.float32)
                       * (-math.log(10000.0) / d_model))                  # (D/2,)
    angles = position * div_term                                          # (L, D/2)
    pe = jnp.zeros((max_len, 1, d_model), dtype=jnp.float32)
    pe = pe.at[:, 0, 0::2].set(jnp.sin(angles))
    pe = pe.at[:, 0, 1::2].set(jnp.cos(angles))
    return pe.astype(dtype)


def _pe_add_kernel(x_ref, pe_ref, o_ref):
    # (TS, N) blocks in VMEM; pure VPU add — the kernel is HBM-bandwidth bound.
    o_ref[...] = x_ref[...] + pe_ref[...]
    # TODO(synk): torch applies Dropout(p=0.1) in training mode; its RNG stream
    # cannot be reproduced, so this is the eval-mode (identity) dropout.  A
    # training variant would use pltpu.prng_seed + pltpu.stateful_bernoulli.


def _choose_seq_block(seq_len: int, row_bytes: int, itemsize: int,
                      target_bytes: int = 2 << 20) -> int:
    """Largest S-tile giving ~target-sized x blocks, aligned to sublane packing."""
    ts = max(1, target_bytes // max(row_bytes, 1))
    if ts >= seq_len:
        return seq_len                       # single block == full array dims: always legal
    min_sub = 8 if itemsize >= 4 else max(8, 32 // itemsize)   # f32:8, bf16:16, int8:32
    return max(min_sub, (ts // min_sub) * min_sub)


def positional_encoding(x: jnp.ndarray, pe: jnp.ndarray, *, seq_block=None) -> jnp.ndarray:
    """x: (S, B, D); pe: (max_len, 1, D).  Returns x + pe[:S] (eval-mode dropout)."""
    S, B, D = x.shape
    max_len = pe.shape[0]
    assert pe.shape == (max_len, 1, D) and max_len >= S

    itemsize = jnp.dtype(x.dtype).itemsize
    N = B * D

    # Free metadata reshape: contiguous trailing axes collapse into the lane axis.
    x2 = x.reshape(S, N)
    # pe is tiny (max_len x D); pre-tiling it across batch once in the wrapper
    # makes every operand the same lane-dense (TS, N) shape.  Cast to x.dtype.
    pe2 = jnp.tile(pe[:, 0, :].astype(x.dtype), (1, B))        # (max_len, N)

    if seq_block is None:
        seq_block = _choose_seq_block(S, N * itemsize, itemsize)
    seq_block = int(min(seq_block, S))
    grid = (pl.cdiv(S, seq_block),)

    # Double-buffered VMEM footprint: 2 x (x block + pe block + out block) + headroom.
    block_bytes = seq_block * N * itemsize
    vmem_need = 2 * 3 * block_bytes + (2 << 20)
    vmem_limit = int(min(max(vmem_need, 8 << 20), 40 << 20))   # safe on v5e/v6e/v7x

    out2 = pl.pallas_call(
        _pe_add_kernel,
        out_shape=jax.ShapeDtypeStruct((S, N), x.dtype),
        grid=grid,
        in_specs=[
            pl.BlockSpec((seq_block, N), lambda i: (i, 0)),
            pl.BlockSpec((seq_block, N), lambda i: (i, 0)),
        ],
        out_specs=pl.BlockSpec((seq_block, N), lambda i: (i, 0)),
        compiler_params=pltpu.CompilerParams(
            dimension_semantics=("parallel",),   # v7x: shard the S loop over both TCs
            vmem_limit_bytes=vmem_limit,
        ),
    )(x2, pe2)
    return out2.reshape(S, B, D)


if __name__ == "__main__":
    d_model = 32
    max_len = 200
    seq_len = 8
    batch = 2

    pe = make_positional_encoding_table(d_model, max_len)
    key = jax.random.PRNGKey(0)
    x = jax.random.normal(key, (seq_len, batch, d_model), dtype=jnp.float32)

    out = jax.block_until_ready(positional_encoding(x, pe))
    ref = x + pe[:seq_len]
    assert out.shape == (seq_len, batch, d_model)
    assert jnp.allclose(out, ref, atol=1e-6, rtol=1e-6)

    # Exercise the pipelined multi-step grid, including a masked partial last
    # block: S=20 with TS=8 -> grid of 3 (last block half out-of-bounds).
    x_long = jax.random.normal(jax.random.PRNGKey(1), (20, batch, d_model),
                               dtype=jnp.float32)
    out_long = jax.block_until_ready(positional_encoding(x_long, pe, seq_block=8))
    assert jnp.allclose(out_long, x_long + pe[:20], atol=1e-6, rtol=1e-6)

    # bf16 path (halves HBM traffic for this purely memory-bound add).
    x_bf16 = x.astype(jnp.bfloat16)
    out_bf16 = jax.block_until_ready(positional_encoding(x_bf16, pe))
    assert jnp.allclose(out_bf16.astype(jnp.float32), ref, atol=5e-2, rtol=5e-2)

    print("KERNEL_OK")
</pallas_src>

<mosaic_0001>
module attributes {stable_mosaic.version = 11 : i64} {
  func.func @_pe_add_kernel(%arg0: i32, %arg1: memref<8x64xf32, #tpu.memory_space<vmem>>, %arg2: memref<8x64xf32, #tpu.memory_space<vmem>>, %arg3: memref<8x64xf32, #tpu.memory_space<vmem>>) attributes {dimension_semantics = [#tpu.dimension_semantics<parallel>], iteration_bounds = array<i64: 1>, scalar_prefetch = 0 : i64, scratch_operands = 0 : i64, tpu.core_type = #tpu.core_type<tc>, window_params = [{transform_indices = @transform_0, window_bounds = array<i64: 8, 64>}, {transform_indices = @transform_1, window_bounds = array<i64: 8, 64>}, {transform_indices = @transform_2, window_bounds = array<i64: 8, 64>}]} {
    %c0 = arith.constant 0 : index
    %c0_0 = arith.constant 0 : index
    %0 = vector.load %arg1[%c0, %c0_0] : memref<8x64xf32, #tpu.memory_space<vmem>>, vector<8x64xf32>
    %c0_1 = arith.constant 0 : index
    %c0_2 = arith.constant 0 : index
    %1 = vector.load %arg2[%c0_1, %c0_2] : memref<8x64xf32, #tpu.memory_space<vmem>>, vector<8x64xf32>
    %2 = arith.addf %0, %1 : vector<8x64xf32>
    %c0_3 = arith.constant 0 : index
    %c0_4 = arith.constant 0 : index
    %3 = vector.load %arg3[%c0_3, %c0_4] : memref<8x64xf32, #tpu.memory_space<vmem>>, vector<8x64xf32>
    tpu.vector_store %arg3[%c0_3, %c0_4], %2 {strides = array<i32>} : memref<8x64xf32, #tpu.memory_space<vmem>>, vector<8x64xf32>,
    return
  }
  func.func @transform_0(%arg0: i32) -> (i32, i32) {
    %c0_i32 = arith.constant 0 : i32
    %c0_i32_0 = arith.constant 0 : i32
    return %arg0, %c0_i32 : i32, i32
  }
  func.func @transform_1(%arg0: i32) -> (i32, i32) {
    %c0_i32 = arith.constant 0 : i32
    %c0_i32_0 = arith.constant 0 : i32
    return %arg0, %c0_i32 : i32, i32
  }
  func.func @transform_2(%arg0: i32) -> (i32, i32) {
    %c0_i32 = arith.constant 0 : i32
    %c0_i32_0 = arith.constant 0 : i32
    return %arg0, %c0_i32 : i32, i32
  }
}

</mosaic_0001>

<llo_original>
// kernel: tpu_custom_call.1
$region0: #{tpu_custom_call.1}
  #allocation0 [shape = 'u32[]', space=smem, size = 0x4, offset = 0x4, fixed_abs, tag = 'smem constant byte address 0x4 - core index']
  #allocation1 [shape = 'u32[144,128]{1,0:T(1,128)}', space=vmem, size = 0x12000, scoped, tag = 'internal scratch']
  %s0 = inlined_call_operand.vmem [shape: f32[8,64], index: 0, kind: input, shape index: {}]
  %s1 = inlined_call_operand.vmem [shape: f32[200,64], index: 1, kind: input, shape index: {}]
  %s2 = inlined_call_operand.hbm [shape: f32[8,64], index: 2, kind: output, shape index: {}]
  %s3 = sld [smem:[#allocation0]]
  $region18: #{tpu_custom_call.1} parent=0
    _
  %s5 = ssub.s32 1, %s3
  %s6 = scalar_select 0, %s5, %s3
  $region1: #{tpu_custom_call.1} parent=0
    #allocation2 [shape = 'u8[4096]{0}', space=vmem, size = 0x1000, scoped, tag = 'output window, operand 0, single buffered']
    #allocation3 [shape = 's32[1]{0}', space=sflag, size = 0x4, scoped, tag = 'scoped memory for tpu_custom_call.1']
    %7 = vsyncpa [#allocation3], 0
    // Predicated region
    $region2: #{tpu_custom_call.1} parent=1 // pred_check
      _
    $region3: #{tpu_custom_call.1} parent=1 // pred_check_branch
      %9 = sbr.rel (0) target = $region5
    $region4: #{tpu_custom_call.1} parent=1 // pred_region
      _
    $region5: #{tpu_custom_call.1} parent=1 // pred_fallthru
      _
    // Predicated region
    $region6: #{tpu_custom_call.1} parent=1 // pred_check
      _
    $region7: #{tpu_custom_call.1} parent=1 // pred_check_branch
      %11 = sbr.rel (0) target = $region9
    $region8: #{tpu_custom_call.1} parent=1 // pred_region
      _
    $region9: #{tpu_custom_call.1} parent=1 // pred_fallthru
      _
    %v12 = vld [vmem:[%s0] sm:$0xff]
    %v13 = vld [vmem:[%s1] sm:$0xff]
    %v14 = vadd.f32 %v12, %v13
    %vm15 = vcmask 523264
    %16 = vst.msk [vmem:[#allocation2] sm:$0xff] %vm15, %v14
    // Predicated region
    $region10: #{tpu_custom_call.1} parent=1 // pred_check
      _
    $region11: #{tpu_custom_call.1} parent=1 // pred_check_branch
      %18 = sbr.rel (0) target = $region13
    $region12: #{tpu_custom_call.1} parent=1 // pred_region
      %s20 = ssub.s32 128, 128
      %21 = vsyncadd [#allocation3], %s20
      %s23 = sshll.u32 [#allocation2], 4
      %s24 = int_to_ptr.vmem [resolvable:$true] %s23
      %26 = dma.vmem_to_hbm [thread:$0]  %s24, 128, %s2, [#allocation3]
    $region13: #{tpu_custom_call.1} parent=1 // pred_fallthru
      _
    // Predicated region
    $region14: #{tpu_custom_call.1} parent=1 // pred_check
      _
    $region15: #{tpu_custom_call.1} parent=1 // pred_check_branch
      %28 = sbr.rel (0) target = $region17
    $region16: #{tpu_custom_call.1} parent=1 // pred_region
      %29 = dma.done [#allocation3], 128
    $region17: #{tpu_custom_call.1} parent=1 // pred_fallthru
      _
    %30 = vsyncpa [#allocation3], 1

</llo_original>
